<compile_context>
chip_gen: v7x
topology: tpu7x:2x2x1
jax: 0.10.0
libtpu: 0.0.40
codegen_flags: <defaults>
</compile_context>

<pallas_src>
import jax
import jax.numpy as jnp
from jax.experimental import pallas as pl
from jax.experimental.pallas import tpu as pltpu


def _round_up(x: int, m: int) -> int:
    return (x + m - 1) // m * m


# ---------------------------------------------------------------------------
# Kernels
# ---------------------------------------------------------------------------
def _matmul_kernel(p_ref, w_ref, o_ref):
    # Weight fully resident in K: one MXU matmul per M tile, f32 accumulation.
    o_ref[...] = jnp.dot(
        p_ref[...], w_ref[...], preferred_element_type=jnp.float32
    ).astype(o_ref.dtype)


def _matmul_acc_kernel(p_ref, w_ref, o_ref, acc_ref):
    # K split across grid axis 1 (reduction axis, last in grid): f32 accumulator.
    k = pl.program_id(1)

    @pl.when(k == 0)
    def _():
        acc_ref[...] = jnp.zeros_like(acc_ref)

    acc_ref[...] += jnp.dot(
        p_ref[...], w_ref[...], preferred_element_type=jnp.float32
    )

    @pl.when(k == pl.num_programs(1) - 1)
    def _():
        o_ref[...] = acc_ref[...].astype(o_ref.dtype)


# ---------------------------------------------------------------------------
# Tiling helpers
# ---------------------------------------------------------------------------
def _tpu_defaults():
    """Per-generation (tile_m target, vmem_limit_bytes)."""
    try:
        cap = pltpu.get_tpu_info().vmem_capacity_bytes
    except Exception:
        cap = 64 * 1024 * 1024
    if cap >= 100 * 1024 * 1024:            # v5e / v6e: 128 MiB physical VMEM
        return 2048, 80 * 1024 * 1024
    return 1024, 44 * 1024 * 1024            # v7x: 64 MiB physical VMEM per TC


def _choose_tile_m(M: int, target: int) -> int:
    """Largest multiple-of-8 tile <= target that divides M (so no materialized
    pad of the patches array); falls back to `target` (with padding) otherwise."""
    target = max(8, min(target, _round_up(M, 8)))
    if M <= target:
        return _round_up(M, 8)
    d = (target // 8) * 8
    while d >= 8:
        if M % d == 0:
            return d
        d -= 8
    return (target // 8) * 8


# ---------------------------------------------------------------------------
# Forward
# ---------------------------------------------------------------------------
def patch_embed(x, weight, patch_size, *,
                compute_dtype=jnp.bfloat16, out_dtype=None,
                tile_m=None, tile_k=None,
                weight_budget_bytes=8 * 1024 * 1024,
                vmem_limit_bytes=None):
    """Pallas PatchEmbed forward.

    Args:
      x:      (B, C, H, W), NCHW (PyTorch convention).
      weight: (E, C, P, P), PyTorch Conv2d weight layout.
      patch_size: int P (kernel_size == stride).
      compute_dtype: matmul operand dtype (bf16 default; pass jnp.float32 for
        f32-exact PyTorch parity at higher HBM traffic / lower MXU rate).
      out_dtype: kernel output dtype (defaults to compute_dtype; cast downstream
        only if the consumer truly needs f32).

    Returns:
      (B, N, E) with N = (H // P) * (W // P), dtype `out_dtype`.
    """
    B, C, H, W = x.shape
    E = weight.shape[0]
    P = int(patch_size)
    gh, gw = H // P, W // P
    N = gh * gw
    K = C * P * P
    M = B * N

    out_dtype = compute_dtype if out_dtype is None else out_dtype
    c_bytes = jnp.dtype(compute_dtype).itemsize
    o_bytes = jnp.dtype(out_dtype).itemsize

    tm_default, vmem_default = _tpu_defaults()
    tile_m = tm_default if tile_m is None else int(tile_m)
    vmem_limit_bytes = vmem_default if vmem_limit_bytes is None else int(vmem_limit_bytes)

    # --- E / K tiling --------------------------------------------------------
    E_pad = _round_up(E, 128)                 # lane-dense, unmasked output stores

    if tile_k is None:
        # Keep the whole weight resident in VMEM whenever it fits the budget;
        # the K-split fallback re-DMAs the weight once per M tile.
        tile_k = K if K * E_pad * c_bytes <= weight_budget_bytes else 512
    if tile_k >= K:
        TILE_K, nk, K_pad = K, 1, K
    else:
        TILE_K = _round_up(min(int(tile_k), K), 128)
        K_pad = _round_up(K, TILE_K)
        nk = K_pad // TILE_K

    # --- M tiling: cap by VMEM working set, prefer a divisor of M (no pad) ---
    weight_vmem = 2 * TILE_K * E_pad * c_bytes                    # double-buffered
    per_row = 2 * TILE_K * c_bytes + 2 * E_pad * o_bytes          # patches + out bufs
    if nk > 1:
        per_row += E_pad * 4                                      # f32 accumulator
    avail = max(vmem_limit_bytes - weight_vmem - (2 << 20), 8 * per_row)
    vmem_cap_rows = max(8, (avail // per_row) // 8 * 8)

    tm_target = min(tile_m, vmem_cap_rows)
    if M >= 1024:
        # Keep >= 2 M tiles so the "parallel" axis gives both v7x TCs work.
        tm_target = min(tm_target, _round_up(M // 2, 8))
    TILE_M = _choose_tile_m(M, tm_target)
    M_pad = _round_up(M, TILE_M)
    nm = M_pad // TILE_M

    # In the resident-weight path, pad K to a 128 multiple only when an M pad
    # already forces a materialized pad pass (a full-extent K block is legal).
    if nk == 1 and M_pad > M and K % 128 != 0:
        K_pad = _round_up(K, 128)

    # --- wrapper glue: im2col patch relayout + compute-dtype cast ------------
    # (B, C, gh, P, gw, P) -> (B, gh, gw, C, P, P) -> (M, K); K ordered (c, ph, pw)
    # to match the PyTorch (E, C, P, P) weight flattening. XLA fuses the cast.
    # TODO(synk): fold this relayout into the kernel (see header note).
    patches = x.reshape(B, C, gh, P, gw, P)
    patches = jnp.transpose(patches, (0, 2, 4, 1, 3, 5)).reshape(M, K)
    patches = patches.astype(compute_dtype)
    w_mat = weight.reshape(E, K).T.astype(compute_dtype)

    if (M_pad, K_pad) != (M, K):
        patches = jnp.pad(patches, ((0, M_pad - M), (0, K_pad - K)))
    if (K_pad, E_pad) != (K, E):
        w_mat = jnp.pad(w_mat, ((0, K_pad - K), (0, E_pad - E)))

    cost = pl.CostEstimate(
        flops=2 * M_pad * K_pad * E_pad,
        transcendentals=0,
        bytes_accessed=(M_pad * K_pad * c_bytes
                        + K_pad * E_pad * c_bytes
                        + M_pad * E_pad * o_bytes),
    )
    out_shape = jax.ShapeDtypeStruct((M_pad, E_pad), out_dtype)

    if nk == 1:
        out = pl.pallas_call(
            _matmul_kernel,
            out_shape=out_shape,
            grid=(nm,),
            in_specs=[
                pl.BlockSpec((TILE_M, K_pad), lambda i: (i, 0)),
                # Constant index_map: Pallas only re-fetches on block change, so
                # the weight is DMA'd once per core and stays resident.
                pl.BlockSpec((K_pad, E_pad), lambda i: (0, 0)),
            ],
            out_specs=pl.BlockSpec((TILE_M, E_pad), lambda i: (i, 0)),
            compiler_params=pltpu.CompilerParams(
                dimension_semantics=("parallel",),
                vmem_limit_bytes=vmem_limit_bytes,
            ),
            cost_estimate=cost,
        )(patches, w_mat)
    else:
        # TODO(synk): consider pipeline_mode=pl.Buffered(3) on the patches spec
        # (v6e DMA-jitter hiding) if this fallback path ever matters in practice.
        out = pl.pallas_call(
            _matmul_acc_kernel,
            out_shape=out_shape,
            grid=(nm, nk),
            in_specs=[
                pl.BlockSpec((TILE_M, TILE_K), lambda i, k: (i, k)),
                pl.BlockSpec((TILE_K, E_pad), lambda i, k: (k, 0)),
            ],
            out_specs=pl.BlockSpec((TILE_M, E_pad), lambda i, k: (i, 0)),
            scratch_shapes=[pltpu.VMEM((TILE_M, E_pad), jnp.float32)],
            compiler_params=pltpu.CompilerParams(
                dimension_semantics=("parallel", "arbitrary"),
                vmem_limit_bytes=vmem_limit_bytes,
            ),
            cost_estimate=cost,
        )(patches, w_mat)

    return out[:M, :E].reshape(B, N, E)


# TODO(synk): optional bias / norm_layer / output_fmt variants not implemented
# (module defaults are bias=False, norm=Identity, flatten=True).


if __name__ == "__main__":
    # Config 1: module-consistent small shapes: B=2, C=4, H=W=16, P=4, E=32.
    B, C, H, W = 2, 4, 16, 16
    P, E = 4, 32

    key = jax.random.PRNGKey(0)
    kx, kw = jax.random.split(key)
    x = jax.random.normal(kx, (B, C, H, W), dtype=jnp.float32)

    # Kaiming-normal init (mode='fan_in', nonlinearity='relu'): std = sqrt(2 / fan_in).
    fan_in = C * P * P
    std = (2.0 / fan_in) ** 0.5
    weight = std * jax.random.normal(kw, (E, C, P, P), dtype=jnp.float32)

    def conv_ref(xx, ww, pp):
        r = jax.lax.conv_general_dilated(
            xx, ww, window_strides=(pp, pp), padding="VALID",
            dimension_numbers=("NCHW", "OIHW", "NCHW"))          # (B, E, gh, gw)
        return r.reshape(r.shape[0], r.shape[1], -1).transpose(0, 2, 1)  # (B, N, E)

    y = patch_embed(x, weight, P)
    jax.block_until_ready(y)
    ref = conv_ref(x, weight, P)
    assert y.shape == (B, (H // P) * (W // P), E)
    assert y.dtype == jnp.bfloat16                       # bf16 output by default
    assert jnp.allclose(y.astype(jnp.float32), ref, atol=5e-2, rtol=5e-2)

    # Config 2 (still small): forces the K-split accumulator path + E padding.
    B2, C2, H2, W2, P2, E2 = 2, 8, 32, 32, 8, 64
    k2x, k2w = jax.random.split(jax.random.PRNGKey(1))
    x2 = jax.random.normal(k2x, (B2, C2, H2, W2), dtype=jnp.float32)
    std2 = (2.0 / (C2 * P2 * P2)) ** 0.5
    w2 = std2 * jax.random.normal(k2w, (E2, C2, P2, P2), dtype=jnp.float32)

    y2 = patch_embed(x2, w2, P2, tile_k=256)             # K=512 -> TILE_K=256, nk=2
    jax.block_until_ready(y2)
    ref2 = conv_ref(x2, w2, P2)
    assert y2.shape == (B2, (H2 // P2) * (W2 // P2), E2)
    assert jnp.allclose(y2.astype(jnp.float32), ref2, atol=5e-2, rtol=5e-2)

    # Config 3: f32 compute/output opt-out (correctness-concern escape hatch).
    y3 = patch_embed(x, weight, P, compute_dtype=jnp.float32, out_dtype=jnp.float32)
    jax.block_until_ready(y3)
    assert y3.dtype == jnp.float32
    assert jnp.allclose(y3, ref, atol=5e-2, rtol=5e-2)

    print("KERNEL_OK")
</pallas_src>

<mosaic_0001>
module attributes {stable_mosaic.version = 11 : i64} {
  func.func @_matmul_kernel(%arg0: i32, %arg1: memref<32x64xbf16, #tpu.memory_space<vmem>>, %arg2: memref<64x128xbf16, #tpu.memory_space<vmem>>, %arg3: memref<32x128xbf16, #tpu.memory_space<vmem>>) attributes {dimension_semantics = [#tpu.dimension_semantics<parallel>], iteration_bounds = array<i64: 1>, scalar_prefetch = 0 : i64, scratch_operands = 0 : i64, tpu.core_type = #tpu.core_type<tc>, window_params = [{transform_indices = @transform_0, window_bounds = array<i64: 32, 64>}, {pipeline_mode = #tpu.pipeline_mode<synchronous>, transform_indices = @transform_1, window_bounds = array<i64: 64, 128>}, {transform_indices = @transform_2, window_bounds = array<i64: 32, 128>}]} {
    %c0 = arith.constant 0 : index
    %c0_0 = arith.constant 0 : index
    %0 = vector.load %arg1[%c0, %c0_0] : memref<32x64xbf16, #tpu.memory_space<vmem>>, vector<32x64xbf16>
    %c0_1 = arith.constant 0 : index
    %c0_2 = arith.constant 0 : index
    %1 = vector.load %arg2[%c0_1, %c0_2] : memref<64x128xbf16, #tpu.memory_space<vmem>>, vector<64x128xbf16>
    %cst = arith.constant dense<0.000000e+00> : vector<32x128xf32>
    %2 = tpu.matmul %0, %1, %cst {dimension_numbers = #tpu.dot_dimension_numbers<[1], [0], [0], [1], [0, 0, 1, 1], [], []>} : vector<32x64xbf16>, vector<64x128xbf16>, vector<32x128xf32> -> vector<32x128xf32>
    %3 = arith.truncf %2 : vector<32x128xf32> to vector<32x128xbf16>
    %c0_3 = arith.constant 0 : index
    %c0_4 = arith.constant 0 : index
    %4 = vector.load %arg3[%c0_3, %c0_4] : memref<32x128xbf16, #tpu.memory_space<vmem>>, vector<32x128xbf16>
    tpu.vector_store %arg3[%c0_3, %c0_4], %3 {strides = array<i32>} : memref<32x128xbf16, #tpu.memory_space<vmem>>, vector<32x128xbf16>,
    return
  }
  func.func @transform_0(%arg0: i32) -> (i32, i32) {
    %c0_i32 = arith.constant 0 : i32
    %c0_i32_0 = arith.constant 0 : i32
    return %arg0, %c0_i32 : i32, i32
  }
  func.func @transform_1(%arg0: i32) -> (i32, i32) {
    %c0_i32 = arith.constant 0 : i32
    %c0_i32_0 = arith.constant 0 : i32
    %c0_i32_1 = arith.constant 0 : i32
    return %c0_i32, %c0_i32_0 : i32, i32
  }
  func.func @transform_2(%arg0: i32) -> (i32, i32) {
    %c0_i32 = arith.constant 0 : i32
    %c0_i32_0 = arith.constant 0 : i32
    return %arg0, %c0_i32 : i32, i32
  }
}

</mosaic_0001>

<llo_original>
// kernel: tpu_custom_call.1
$region0: #{tpu_custom_call.1}
  #allocation0 [shape = 'u32[]', space=smem, size = 0x4, offset = 0x4, fixed_abs, tag = 'smem constant byte address 0x4 - core index']
  #allocation1 [shape = 'u32[144,128]{1,0:T(1,128)}', space=vmem, size = 0x12000, scoped, tag = 'internal scratch']
  %s0 = inlined_call_operand.hbm [shape: bf16[32,64], index: 0, kind: input, shape index: {}]
  %s1 = inlined_call_operand.hbm [shape: bf16[64,128], index: 1, kind: input, shape index: {}]
  %s2 = inlined_call_operand.hbm [shape: bf16[32,128], index: 2, kind: output, shape index: {}]
  %s3 = sld [smem:[#allocation0]]
  $region26: #{tpu_custom_call.1} parent=0
    _
  %s5 = ssub.s32 1, %s3
  %s6 = scalar_select 0, %s5, %s3
  $region1: #{tpu_custom_call.1} parent=0
    #allocation2 [shape = 'u8[8192]{0}', space=vmem, size = 0x2000, scoped, tag = 'input window, operand 0, single buffered']
    #allocation3 [shape = 's32[1]{0}', space=sflag, size = 0x4, scoped, tag = 'scoped memory for tpu_custom_call.1']
    #allocation4 [shape = 's32[1]{0}', space=sflag, size = 0x4, scoped, tag = 'scoped memory for tpu_custom_call.1']
    #allocation5 [shape = 'u8[16384]{0}', space=vmem, size = 0x4000, scoped, tag = 'input window, operand 1, single buffered']
    #allocation6 [shape = 's32[1]{0}', space=sflag, size = 0x4, scoped, tag = 'scoped memory for tpu_custom_call.1']
    #allocation7 [shape = 'u8[8192]{0}', space=vmem, size = 0x2000, scoped, tag = 'output window, operand 0, single buffered']
    %7 = vsyncpa [#allocation3], 0
    %8 = vsyncpa [#allocation6], 0
    %9 = vsyncpa [#allocation4], 0
    // Predicated region
    $region2: #{tpu_custom_call.1} parent=1 // pred_check
      _
    $region3: #{tpu_custom_call.1} parent=1 // pred_check_branch
      %11 = sbr.rel (0) target = $region5
    $region4: #{tpu_custom_call.1} parent=1 // pred_region
      %s13 = ssub.s32 256, 256
      %14 = vsyncadd [#allocation3], %s13
      %s15 = sshll.u32 [#allocation2], 4
      %s16 = int_to_ptr.vmem [resolvable:$true] %s15
      %21 = dma.hbm_to_vmem [thread:$0]  %s0, 256, %s16, [#allocation3], 64, 64, 4
    $region5: #{tpu_custom_call.1} parent=1 // pred_fallthru
      _
    // Predicated region
    $region6: #{tpu_custom_call.1} parent=1 // pred_check
      _
    $region7: #{tpu_custom_call.1} parent=1 // pred_check_branch
      %23 = sbr.rel (0) target = $region9
    $region8: #{tpu_custom_call.1} parent=1 // pred_region
      %s25 = ssub.s32 512, 512
      %26 = vsyncadd [#allocation6], %s25
      %s27 = sshll.u32 [#allocation5], 4
      %s28 = int_to_ptr.vmem [resolvable:$true] %s27
      %33 = dma.hbm_to_vmem [thread:$0]  %s1, 512, %s28, [#allocation6], 64, 64, 4
    $region9: #{tpu_custom_call.1} parent=1 // pred_fallthru
      _
    // Predicated region
    $region10: #{tpu_custom_call.1} parent=1 // pred_check
      _
    $region11: #{tpu_custom_call.1} parent=1 // pred_check_branch
      %35 = sbr.rel (0) target = $region13
    $region12: #{tpu_custom_call.1} parent=1 // pred_region
      %36 = dma.done [#allocation3], 256
    $region13: #{tpu_custom_call.1} parent=1 // pred_fallthru
      _
    // Predicated region
    $region14: #{tpu_custom_call.1} parent=1 // pred_check
      _
    $region15: #{tpu_custom_call.1} parent=1 // pred_check_branch
      %38 = sbr.rel (0) target = $region17
    $region16: #{tpu_custom_call.1} parent=1 // pred_region
      %39 = dma.done [#allocation6], 512
    $region17: #{tpu_custom_call.1} parent=1 // pred_fallthru
      _
    %v41 = vld [vmem:[#allocation2] sm:$0xf]
    %v42 = vld [vmem:[#allocation2 + $0x4] sm:$0xf]
    %v43 = vld [vmem:[#allocation2 + $0x8] sm:$0xf]
    %v44 = vld [vmem:[#allocation2 + $0xc] sm:$0xf]
    %v45 = vld [vmem:[#allocation5] sm:$0xf]
    %v46 = vld [vmem:[#allocation5 + $0x4] sm:$0xf]
    %v47 = vld [vmem:[#allocation5 + $0x8] sm:$0xf]
    %v48 = vld [vmem:[#allocation5 + $0xc] sm:$0xf]
    %v49 = vld [vmem:[#allocation5 + $0x10] sm:$0xf]
    %v50 = vld [vmem:[#allocation5 + $0x14] sm:$0xf]
    %v51 = vld [vmem:[#allocation5 + $0x18] sm:$0xf]
    %v52 = vld [vmem:[#allocation5 + $0x1c] sm:$0xf]
    %v57 = vunpack.c.l.b16 %v41
    %v58 = vunpack.c.l.b16 %v42
    %v59 = vunpack.c.l.b16 %v43
    %v60 = vunpack.c.l.b16 %v44
    %v61 = vpack.c.b16 %v58, %v57
    %v62 = vpack.c.b16 %v60, %v59
    %v71 = vunpack.c.l.b16 %v45
    %v72 = vunpack.c.l.b16 %v46
    %v73 = vunpack.c.l.b16 %v47
    %v74 = vunpack.c.l.b16 %v48
    %v75 = vunpack.c.l.b16 %v49
    %v76 = vunpack.c.l.b16 %v50
    %v77 = vunpack.c.l.b16 %v51
    %v78 = vunpack.c.l.b16 %v52
    %v79 = vpack.c.b16 %v72, %v71
    %v80 = vpack.c.b16 %v74, %v73
    %v81 = vpack.c.b16 %v76, %v75
    %v82 = vpack.c.b16 %v78, %v77
    %vm87 = vcmask 523264
    %v89 = vsel %vm87, %v61, 0
    %v92 = vsel %vm87, %v62, 0
    %94 = vmatprep.subr.bf16.mxu0 0
    %95 = vmatpush1.bf16.msra.mxu0 %v79
    %96 = vmatprep.subr.bf16.mxu0 0
    %97 = vmatpush1.bf16.msra.mxu0 %v80
    %98 = vmatprep.subr.bf16.mxu0 0
    %99 = vmatpush1.bf16.msra.mxu0 %v81
    %100 = vmatprep.subr.bf16.mxu0 0
    %101 = vmatpush1.bf16.msra.mxu0 %v82
    %102 = vmatprep.subr.bf16.mxu0 0
    %103 = vmatpush1.bf16.msra.mxu0 0
    %104 = vmatprep.subr.bf16.mxu0 0
    %105 = vmatpush1.bf16.msra.mxu0 0
    %106 = vmatprep.subr.bf16.mxu0 0
    %107 = vmatpush1.bf16.msra.mxu0 0
    %108 = vmatprep.subr.bf16.mxu0 0
    %109 = vmatpush1.bf16.msra.mxu0 0
    %110 = vmatprep.subr.bf16.mxu0 0
    %111 = vmatpush1.bf16.msra.mxu0 0
    %112 = vmatprep.subr.bf16.mxu0 0
    %113 = vmatpush1.bf16.msra.mxu0 0
    %114 = vmatprep.subr.bf16.mxu0 0
    %115 = vmatpush1.bf16.msra.mxu0 0
    %116 = vmatprep.subr.bf16.mxu0 0
    %117 = vmatpush1.bf16.msra.mxu0 0
    %118 = vmatprep.subr.bf16.mxu0 0
    %119 = vmatpush1.bf16.msra.mxu0 0
    %120 = vmatprep.subr.bf16.mxu0 0
    %121 = vmatpush1.bf16.msra.mxu0 0
    %122 = vmatprep.subr.bf16.mxu0 0
    %123 = vmatpush1.bf16.msra.mxu0 0
    %124 = vmatprep.subr.bf16.mxu0 0
    %125 = vmatpush1.bf16.msra.mxu0 0
    %126 = vmatprep.mubr.bf16.mxu0 0
    %127 = vmatmul.mubr.bf16.gmra.mrb[0].mxu0 %v89
    %v128 = vpop.f32.mrb[0].mxu0
    %v129 = vadd.f32 0.0, %v128
    %v130 = vpop.f32.mrb[0].mxu0
    %v131 = vpop.f32.mrb[0].mxu0
    %v132 = vadd.f32 0.0, %v131
    %v133 = vpop.f32.mrb[0].mxu0
    %134 = vmatprep.mubr.bf16.mxu0 0
    %135 = vmatmul.mubr.bf16.gmra.mrb[0].mxu0 %v92
    %v136 = vpop.f32.mrb[0].mxu0
    %v137 = vadd.f32 0.0, %v136
    %v138 = vpop.f32.mrb[0].mxu0
    %v139 = vpop.f32.mrb[0].mxu0
    %v140 = vadd.f32 0.0, %v139
    %v141 = vpop.f32.mrb[0].mxu0
    %142 = vdwg.mxu0
    %v143 = vpack.c.bf16 %v132, %v129
    %v144 = vpack.c.bf16 %v140, %v137
    %v147 = vunpack.c.l.b16 %v143
    %v148 = vunpack.c.h.b16 %v143
    %v149 = vunpack.c.l.b16 %v144
    %v150 = vunpack.c.h.b16 %v144
    %v151 = vpack.c.b16 %v147, %v147
    %v152 = vpack.c.b16 %v148, %v148
    %v153 = vpack.c.b16 %v149, %v149
    %v154 = vpack.c.b16 %v150, %v150
    %159 = vst [vmem:[#allocation7] sm:$0xf] %v151
    %160 = vst [vmem:[#allocation7 + $0x4] sm:$0xf] %v152
    %161 = vst [vmem:[#allocation7 + $0x8] sm:$0xf] %v153
    %162 = vst [vmem:[#allocation7 + $0xc] sm:$0xf] %v154
    // Predicated region
    $region18: #{tpu_custom_call.1} parent=1 // pred_check
      _
    $region19: #{tpu_custom_call.1} parent=1 // pred_check_branch
      %164 = sbr.rel (0) target = $region21
    $region20: #{tpu_custom_call.1} parent=1 // pred_region
      %s166 = ssub.s32 256, 256
      %167 = vsyncadd [#allocation4], %s166
      %s168 = sshll.u32 [#allocation7], 4
      %s169 = int_to_ptr.vmem [resolvable:$true] %s168
      %174 = dma.vmem_to_hbm [thread:$0]  %s169, 256, %s2, [#allocation4], 64, 64, 4
    $region21: #{tpu_custom_call.1} parent=1 // pred_fallthru
      _
    // Predicated region
    $region22: #{tpu_custom_call.1} parent=1 // pred_check
      _
    $region23: #{tpu_custom_call.1} parent=1 // pred_check_branch
      %176 = sbr.rel (0) target = $region25
    $region24: #{tpu_custom_call.1} parent=1 // pred_region
      %177 = dma.done [#allocation4], 256
    $region25: #{tpu_custom_call.1} parent=1 // pred_fallthru
      _
    %178 = vsyncpa [#allocation3], 1
    %179 = vsyncpa [#allocation6], 1
    %180 = vsyncpa [#allocation4], 1

</llo_original>
